<compile_context>
chip_gen: v5e
topology: v5e:2x2
jax: 0.10.0
libtpu: 0.0.40
codegen_flags: <defaults>
</compile_context>

<pallas_src>
import math

import jax
import jax.numpy as jnp
from jax.experimental import pallas as pl
from jax.experimental.pallas import tpu as pltpu


def _layer_scale_kernel(x_ref, g_ref, o_ref):
    # x_ref: (TM, TN) tile of activations, g_ref: (1, TN) gamma row (f32).
    # Multiply in f32 (gamma stays full precision), cast only the result.
    o_ref[...] = (x_ref[...] * g_ref[...]).astype(o_ref.dtype)


def _vmem_capacity_bytes() -> int:
    """Best-effort physical VMEM capacity; falls back to 128 MiB (v5e/v6e)."""
    try:
        info = pltpu.get_tpu_info()
        cap = getattr(info, "vmem_capacity_bytes", None)
        if cap:
            return int(cap)
    except Exception:
        pass
    return 128 * 1024 * 1024


def _scale_2d(x2: jnp.ndarray, g2: jnp.ndarray, *, donate_x: bool = False) -> jnp.ndarray:
    """x2: (M2, D2) activations, g2: (1, D2) float32 gamma. Returns x2 * g2."""
    M2, D2 = x2.shape
    dtype = x2.dtype
    itemsize = jnp.dtype(dtype).itemsize
    sublane = {2: 16, 1: 32}.get(itemsize, 8)

    vmem_cap = _vmem_capacity_bytes()
    # Per-step bytes of x: bigger steps on v7x (faster HBM amortizes the fixed
    # ~0.35 us/step overhead), 4 MiB elsewhere (measured plateau on v6e).
    if vmem_cap <= 96 * 1024 * 1024:          # v7x: 64 MiB physical VMEM
        target_bytes = 8 * 1024 * 1024
    else:                                      # v5e / v6e: 128 MiB physical
        target_bytes = 4 * 1024 * 1024

    row_bytes = D2 * itemsize
    if sublane * row_bytes > target_bytes:
        # Huge-D: even a minimal row strip blows the budget -> tile lanes too.
        tm = min(M2, sublane)
        tn = max(128, (target_bytes // (sublane * itemsize)) // 128 * 128)
        tn = min(tn, D2)
    else:
        tm = (target_bytes // row_bytes) // sublane * sublane
        tm = max(sublane, tm)
        if M2 <= tm:
            tm = M2  # full-extent block is always a legal block shape
        tn = D2

    grid = (pl.cdiv(M2, tm), pl.cdiv(D2, tn))

    # Double-buffered input + output tiles + gamma, with headroom; never ask
    # for more than ~75% of physical VMEM (v7x is the binding case).
    buf_bytes = 2 * (tm * tn * itemsize) * 2 + 2 * tn * 4
    vmem_limit = buf_bytes + (8 << 20)
    vmem_limit = max(vmem_limit, 16 << 20)
    vmem_limit = min(vmem_limit, (vmem_cap * 3) // 4)

    cost = pl.CostEstimate(
        flops=int(M2) * int(D2),
        transcendentals=0,
        bytes_accessed=2 * int(M2) * int(D2) * itemsize + int(D2) * 4,
    )

    extra = {}
    if donate_x:
        extra["input_output_aliases"] = {0: 0}

    return pl.pallas_call(
        _layer_scale_kernel,
        out_shape=jax.ShapeDtypeStruct((M2, D2), dtype),
        grid=grid,
        in_specs=[
            pl.BlockSpec((tm, tn), lambda i, j: (i, j)),
            pl.BlockSpec((1, tn), lambda i, j: (0, j)),
        ],
        out_specs=pl.BlockSpec((tm, tn), lambda i, j: (i, j)),
        compiler_params=pltpu.CompilerParams(
            dimension_semantics=("parallel", "parallel"),
            vmem_limit_bytes=int(vmem_limit),
        ),
        cost_estimate=cost,
        **extra,
    )(x2, g2)


def layer_scale(x: jnp.ndarray, gamma: jnp.ndarray, *, donate_x: bool = False) -> jnp.ndarray:
    """Pallas LayerScale: x * gamma, gamma shape (D,), broadcast over leading axes."""
    orig_shape = x.shape
    dtype = x.dtype
    gamma_f32 = gamma.astype(jnp.float32)

    # Degenerate shapes (empty array / zero-sized dims): nothing for Pallas to do.
    if x.size == 0:
        return (x * gamma_f32).astype(dtype)

    D = int(orig_shape[-1])
    M = math.prod(orig_shape[:-1]) if len(orig_shape) > 1 else 1
    x_flat = x.reshape(M, D)

    # Lane-density folding: fold k rows into one so the last dim is a multiple
    # of 128 (gamma tiled k times) -> unmasked full-width stores.
    k = 128 // math.gcd(D, 128)

    def run_folded(rows2d, n_rows):
        if k > 1:
            d2 = D * k
            g2 = jnp.tile(gamma_f32, k).reshape(1, d2)
            y = _scale_2d(rows2d.reshape(n_rows // k, d2), g2, donate_x=donate_x)
            return y.reshape(n_rows, D)
        return _scale_2d(rows2d, gamma_f32.reshape(1, D), donate_x=donate_x)

    if k == 1 or M % k == 0:
        out_flat = run_folded(x_flat, M)
    else:
        # D not a multiple of 128 and rows don't fold evenly: keep the bulk of
        # the rows lane-dense; handle the tiny remainder (< k rows) in plain JAX.
        m_main = (M // k) * k
        if m_main == 0:
            out_flat = (x_flat * gamma_f32).astype(dtype)
        else:
            main = run_folded(x_flat[:m_main], m_main)
            rem = (x_flat[m_main:] * gamma_f32).astype(dtype)
            # TODO(synk): concatenate costs one extra output copy; prefer padding
            # M up to a multiple of k at the producer to avoid it.
            out_flat = jnp.concatenate([main, rem], axis=0)

    return out_flat.reshape(orig_shape)


if __name__ == "__main__":
    # Module config (matches LayerScale.__init__): dim=32, init_values=1e-5.
    dim = 32
    init_values = 1e-5
    gamma = init_values * jnp.ones((dim,), dtype=jnp.float32)

    # Deterministic example input: batch=2, seq=8, hidden=32.
    key = jax.random.PRNGKey(0)
    x = jax.random.normal(key, (2, 8, dim), dtype=jnp.float32)

    out = jax.block_until_ready(layer_scale(x, gamma))
    ref = x * gamma
    assert out.shape == x.shape and out.dtype == x.dtype
    assert jnp.allclose(out, ref, rtol=1e-6, atol=1e-6)

    # Transformer-ish shape: D already lane-dense (multiple of 128), tiled grid.
    x2 = jax.random.normal(jax.random.PRNGKey(1), (4, 256, 256), dtype=jnp.float32)
    g2 = jax.random.normal(jax.random.PRNGKey(2), (256,), dtype=jnp.float32)
    out2 = jax.block_until_ready(layer_scale(x2, g2))
    assert jnp.allclose(out2, x2 * g2, rtol=1e-6, atol=1e-6)

    # bf16 activations with f32 gamma (multiply done in f32, result cast down).
    x3 = jax.random.normal(jax.random.PRNGKey(3), (2, 8, dim), dtype=jnp.bfloat16)
    out3 = jax.block_until_ready(layer_scale(x3, gamma))
    ref3 = (x3.astype(jnp.float32) * gamma).astype(jnp.bfloat16)
    assert out3.dtype == jnp.bfloat16
    assert jnp.allclose(out3.astype(jnp.float32), ref3.astype(jnp.float32),
                        rtol=1e-2, atol=1e-7)

    # Lane-sparse fallback path: D=32 (k=4), M=15 not a multiple of k.
    x4 = jax.random.normal(jax.random.PRNGKey(4), (3, 5, dim), dtype=jnp.float32)
    out4 = jax.block_until_ready(layer_scale(x4, gamma))
    assert jnp.allclose(out4, x4 * gamma, rtol=1e-6, atol=1e-6)

    print("KERNEL_OK")
</pallas_src>

<mosaic_0001>
module attributes {stable_mosaic.version = 11 : i64} {
  func.func @_layer_scale_kernel(%arg0: i32, %arg1: i32, %arg2: memref<4x128xf32, #tpu.memory_space<vmem>>, %arg3: memref<1x128xf32, #tpu.memory_space<vmem>>, %arg4: memref<4x128xf32, #tpu.memory_space<vmem>>) attributes {dimension_semantics = [#tpu.dimension_semantics<parallel>, #tpu.dimension_semantics<parallel>], iteration_bounds = array<i64: 1, 1>, scalar_prefetch = 0 : i64, scratch_operands = 0 : i64, tpu.core_type = #tpu.core_type<tc>, window_params = [{transform_indices = @transform_0, window_bounds = array<i64: 4, 128>}, {transform_indices = @transform_1, window_bounds = array<i64: 1, 128>}, {transform_indices = @transform_2, window_bounds = array<i64: 4, 128>}]} {
    %c0 = arith.constant 0 : index
    %c0_0 = arith.constant 0 : index
    %0 = vector.load %arg2[%c0, %c0_0] : memref<4x128xf32, #tpu.memory_space<vmem>>, vector<4x128xf32>
    %c0_1 = arith.constant 0 : index
    %c0_2 = arith.constant 0 : index
    %1 = vector.load %arg3[%c0_1, %c0_2] : memref<1x128xf32, #tpu.memory_space<vmem>>, vector<1x128xf32>
    %2 = vector.broadcast %1 : vector<1x128xf32> to vector<4x128xf32>
    %3 = arith.mulf %0, %2 : vector<4x128xf32>
    %c0_3 = arith.constant 0 : index
    %c0_4 = arith.constant 0 : index
    %4 = vector.load %arg4[%c0_3, %c0_4] : memref<4x128xf32, #tpu.memory_space<vmem>>, vector<4x128xf32>
    tpu.vector_store %arg4[%c0_3, %c0_4], %3 {strides = array<i32>} : memref<4x128xf32, #tpu.memory_space<vmem>>, vector<4x128xf32>,
    return
  }
  func.func @transform_0(%arg0: i32, %arg1: i32) -> (i32, i32) {
    %c0_i32 = arith.constant 0 : i32
    return %arg0, %arg1 : i32, i32
  }
  func.func @transform_1(%arg0: i32, %arg1: i32) -> (i32, i32) {
    %c0_i32 = arith.constant 0 : i32
    %c0_i32_0 = arith.constant 0 : i32
    return %c0_i32, %arg1 : i32, i32
  }
  func.func @transform_2(%arg0: i32, %arg1: i32) -> (i32, i32) {
    %c0_i32 = arith.constant 0 : i32
    return %arg0, %arg1 : i32, i32
  }
}

</mosaic_0001>

<llo_original>
// kernel: tpu_custom_call.1
$region0: #{tpu_custom_call.1}
  #allocation0 [shape = 'u32[]', space=smem, size = 0x4, offset = 0x4, fixed_abs, tag = 'smem constant byte address 0x4 - core index']
  #allocation1 [shape = 'u32[72,128]{1,0:T(1,128)}', space=vmem, size = 0x9000, scoped, tag = 'internal scratch']
  %s0 = inlined_call_operand.hbm [shape: f32[4,128], index: 0, kind: input, shape index: {}]
  %s1 = inlined_call_operand.hbm [shape: f32[1,128], index: 1, kind: input, shape index: {}]
  %s2 = inlined_call_operand.hbm [shape: f32[4,128], index: 2, kind: output, shape index: {}]
  %s3 = sld [smem:[#allocation0]]
  $region26: #{tpu_custom_call.1} parent=0
    _
  %s5 = ssub.s32 1, %s3
  %s6 = scalar_select 0, %s5, %s3
  $region1: #{tpu_custom_call.1} parent=0
    #allocation2 [shape = 'u8[2048]{0}', space=vmem, size = 0x800, scoped, tag = 'input window, operand 0, single buffered']
    #allocation3 [shape = 's32[1]{0}', space=sflag, size = 0x4, scoped, tag = 'scoped memory for tpu_custom_call.1']
    #allocation4 [shape = 's32[1]{0}', space=sflag, size = 0x4, scoped, tag = 'scoped memory for tpu_custom_call.1']
    #allocation5 [shape = 'u8[512]{0}', space=vmem, size = 0x400, scoped, tag = 'input window, operand 1, single buffered']
    #allocation6 [shape = 's32[1]{0}', space=sflag, size = 0x4, scoped, tag = 'scoped memory for tpu_custom_call.1']
    #allocation7 [shape = 'u8[2048]{0}', space=vmem, size = 0x800, scoped, tag = 'output window, operand 0, single buffered']
    %7 = vsyncpa [#allocation3], 0
    %8 = vsyncpa [#allocation6], 0
    %9 = vsyncpa [#allocation4], 0
    // Predicated region
    $region2: #{tpu_custom_call.1} parent=1 // pred_check
      _
    $region3: #{tpu_custom_call.1} parent=1 // pred_check_branch
      %11 = sbr.rel (0) target = $region5
    $region4: #{tpu_custom_call.1} parent=1 // pred_region
      %13 = vsyncadd [#allocation3], 0
      %s15 = sshll.u32 %s0, 4
      %s16 = int_to_ptr.hbm [resolvable:$true] %s15
      %s17 = sshll.u32 [#allocation2], 4
      %s18 = int_to_ptr.vmem [resolvable:$true] %s17
      %20 = dma.hbm_to_vmem [thread:$0]  %s16, 64, %s18, [#allocation3]
    $region5: #{tpu_custom_call.1} parent=1 // pred_fallthru
      _
    // Predicated region
    $region6: #{tpu_custom_call.1} parent=1 // pred_check
      _
    $region7: #{tpu_custom_call.1} parent=1 // pred_check_branch
      %22 = sbr.rel (0) target = $region9
    $region8: #{tpu_custom_call.1} parent=1 // pred_region
      %24 = vsyncadd [#allocation6], 0
      %s26 = sshll.u32 %s1, 4
      %s27 = int_to_ptr.hbm [resolvable:$true] %s26
      %s28 = sshll.u32 [#allocation5], 4
      %s29 = int_to_ptr.vmem [resolvable:$true] %s28
      %31 = dma.hbm_to_vmem [thread:$0]  %s27, 16, %s29, [#allocation6]
    $region9: #{tpu_custom_call.1} parent=1 // pred_fallthru
      _
    // Predicated region
    $region10: #{tpu_custom_call.1} parent=1 // pred_check
      _
    $region11: #{tpu_custom_call.1} parent=1 // pred_check_branch
      %33 = sbr.rel (0) target = $region13
    $region12: #{tpu_custom_call.1} parent=1 // pred_region
      %35 = dma.done [#allocation3], 64
    $region13: #{tpu_custom_call.1} parent=1 // pred_fallthru
      _
    // Predicated region
    $region14: #{tpu_custom_call.1} parent=1 // pred_check
      _
    $region15: #{tpu_custom_call.1} parent=1 // pred_check_branch
      %37 = sbr.rel (0) target = $region17
    $region16: #{tpu_custom_call.1} parent=1 // pred_region
      %39 = dma.done [#allocation6], 16
    $region17: #{tpu_custom_call.1} parent=1 // pred_fallthru
      _
    %v40 = vld [vmem:[#allocation2] sm:$0xf]
    %v41 = vld [vmem:[#allocation5] sm:$0x1]
    %v43 = vperm.slane %v41, 0
    %v45 = vmul.f32 %v40, %v43
    %46 = vst [vmem:[#allocation7] sm:$0xf] %v45
    // Predicated region
    $region18: #{tpu_custom_call.1} parent=1 // pred_check
      _
    $region19: #{tpu_custom_call.1} parent=1 // pred_check_branch
      %48 = sbr.rel (0) target = $region21
    $region20: #{tpu_custom_call.1} parent=1 // pred_region
      %50 = vsyncadd [#allocation4], 0
      %s52 = sshll.u32 [#allocation7], 4
      %s53 = int_to_ptr.vmem [resolvable:$true] %s52
      %s54 = sshll.u32 %s2, 4
      %s55 = int_to_ptr.hbm [resolvable:$true] %s54
      %57 = dma.vmem_to_hbm [thread:$0]  %s53, 64, %s55, [#allocation4]
    $region21: #{tpu_custom_call.1} parent=1 // pred_fallthru
      _
    // Predicated region
    $region22: #{tpu_custom_call.1} parent=1 // pred_check
      _
    $region23: #{tpu_custom_call.1} parent=1 // pred_check_branch
      %59 = sbr.rel (0) target = $region25
    $region24: #{tpu_custom_call.1} parent=1 // pred_region
      %61 = dma.done [#allocation4], 64
    $region25: #{tpu_custom_call.1} parent=1 // pred_fallthru
      _
    %62 = vsyncpa [#allocation3], 1
    %63 = vsyncpa [#allocation6], 1
    %64 = vsyncpa [#allocation4], 1

</llo_original>
